<compile_context>
chip_gen: v5e
topology: v5e:2x2
jax: 0.10.0
libtpu: 0.0.40
codegen_flags: <defaults>
</compile_context>

<pallas_src>
import jax
import jax.numpy as jnp
from jax.experimental import pallas as pl
from jax.experimental.pallas import tpu as pltpu

IN_F, H1, H2, OUT = 784, 128, 64, 10
OUT_PAD = 128                      # lane-dense padded logits width


def _round_up(n, m):
    return ((n + m - 1) // m) * m


def _pick_tile(B, x_itemsize):
    """Pick batch-tile rows and a VMEM budget from the generation's capacity."""
    try:
        vmem_cap = pltpu.get_tpu_info().vmem_capacity_bytes
    except Exception:
        vmem_cap = 64 << 20
    small_vmem = vmem_cap <= (64 << 20)          # v7x-class part (64 MiB / TC)
    cap = 4096 if small_vmem else 8192           # v5e/v6e: 128 MiB VMEM -> go big
    # v7x has 2 TensorCores: keep the grid at >= 2 steps so the "parallel"
    # batch axis can shard across them even for modest batches.
    target = pl.cdiv(B, 2) if small_vmem else B
    tb = min(cap, max(16, _round_up(target, 16)))
    return tb, vmem_cap


def _vmem_limit(tb, x_itemsize, vmem_cap):
    # double-buffered x tile + out tile, plus resident weights & headroom
    need = 2 * (tb * IN_F * x_itemsize + tb * OUT_PAD * 2) + (4 << 20)
    return int(min(max(need, 32 << 20), vmem_cap * 0.9))


def mlp_kernel(x_ref, w1_ref, b1_ref, w2_ref, b2_ref, w3_ref, b3_ref, o_ref):
    # Cast x to bf16 in-kernel (no wrapper-side materialization of a cast copy).
    x = x_ref[...].astype(jnp.bfloat16)
    # Layer 1: [tb,784](bf16) @ [784,128](bf16) -> f32, + bias, ReLU
    h1 = jnp.dot(x, w1_ref[...], preferred_element_type=jnp.float32)
    h1 = jnp.maximum(h1 + b1_ref[...], 0.0)
    # Layer 2: [tb,128] @ [128,64] -> f32, + bias, ReLU
    h2 = jnp.dot(h1.astype(jnp.bfloat16), w2_ref[...],
                 preferred_element_type=jnp.float32)
    h2 = jnp.maximum(h2 + b2_ref[...], 0.0)
    # Layer 3 (logits, lane-padded to 128, no activation), write back as bf16.
    logits = jnp.dot(h2.astype(jnp.bfloat16), w3_ref[...],
                     preferred_element_type=jnp.float32) + b3_ref[...]
    o_ref[...] = logits.astype(jnp.bfloat16)


def mlp_forward(x, params, tb=None):
    """x: any shape flattening to 784 features per row (NCHW MNIST-like ok)."""
    w1, b1, w2, b2, w3, b3 = params
    x2d = x.reshape(-1, IN_F)                    # torch: x.view(-1, 784) (a view)
    if not jnp.issubdtype(x2d.dtype, jnp.floating):
        x2d = x2d.astype(jnp.float32)
    B = x2d.shape[0]
    itemsize = jnp.dtype(x2d.dtype).itemsize

    tb_auto, vmem_cap = _pick_tile(B, itemsize)
    if tb is None:
        tb = tb_auto
    tb = max(16, _round_up(int(tb), 16))         # bf16 output needs >=16-row tiles
    num_tiles = pl.cdiv(B, tb)                   # ragged last block: no batch pad

    # Weights in bf16 (tiny, one-time), biases f32; W3/b3 lane-padded to 128.
    w1b = w1.astype(jnp.bfloat16)
    w2b = w2.astype(jnp.bfloat16)
    w3p = jnp.zeros((H2, OUT_PAD), jnp.bfloat16).at[:, :OUT].set(
        w3.astype(jnp.bfloat16))
    b1f = b1.astype(jnp.float32).reshape(1, H1)
    b2f = b2.astype(jnp.float32).reshape(1, H2)
    b3p = jnp.zeros((1, OUT_PAD), jnp.float32).at[:, :OUT].set(
        b3.astype(jnp.float32).reshape(1, OUT))

    flops = 2 * B * (IN_F * H1 + H1 * H2 + H2 * OUT)
    bytes_accessed = (B * IN_F * itemsize                 # x read
                      + B * OUT_PAD * 2                   # bf16 logits write
                      + (IN_F * H1 + H1 * H2 + H2 * OUT_PAD) * 2
                      + (H1 + H2 + OUT_PAD) * 4)

    out = pl.pallas_call(
        mlp_kernel,
        out_shape=jax.ShapeDtypeStruct((B, OUT_PAD), jnp.bfloat16),
        grid=(num_tiles,),
        in_specs=[
            pl.BlockSpec((tb, IN_F), lambda i: (i, 0)),      # x: batch-tiled
            pl.BlockSpec((IN_F, H1), lambda i: (0, 0)),      # W1: resident
            pl.BlockSpec((1, H1), lambda i: (0, 0)),         # b1: resident
            pl.BlockSpec((H1, H2), lambda i: (0, 0)),        # W2: resident
            pl.BlockSpec((1, H2), lambda i: (0, 0)),         # b2: resident
            pl.BlockSpec((H2, OUT_PAD), lambda i: (0, 0)),   # W3: resident
            pl.BlockSpec((1, OUT_PAD), lambda i: (0, 0)),    # b3: resident
        ],
        out_specs=pl.BlockSpec((tb, OUT_PAD), lambda i: (i, 0)),
        compiler_params=pltpu.CompilerParams(
            dimension_semantics=("parallel",),
            vmem_limit_bytes=_vmem_limit(tb, itemsize, vmem_cap),
        ),
        cost_estimate=pl.CostEstimate(
            flops=flops, transcendentals=0, bytes_accessed=bytes_accessed),
    )(x2d, w1b, b1f, w2b, b2f, w3p, b3p)

    return out[:, :OUT].astype(jnp.float32)


def init_params(key):
    """Deterministic init mirroring nn.Linear shapes (weights stored as [in,out])."""
    dims = [(IN_F, H1), (H1, H2), (H2, OUT)]
    params = []
    for i, (fan_in, fan_out) in enumerate(dims):
        kw, kb, key = jax.random.split(jax.random.fold_in(key, i), 3)
        bound = 1.0 / jnp.sqrt(fan_in)
        w = jax.random.uniform(kw, (fan_in, fan_out), jnp.float32, -bound, bound)
        b = jax.random.uniform(kb, (1, fan_out), jnp.float32, -bound, bound)
        params += [w, b]
    return tuple(params)


def _bf16(v):
    return v.astype(jnp.bfloat16).astype(jnp.float32)


def mlp_reference_bf16(x, params):
    """Reference mirroring the kernel's bf16 casts (f32 accumulation, bf16 logits)."""
    w1, b1, w2, b2, w3, b3 = params
    x2d = _bf16(x.reshape(-1, IN_F).astype(jnp.float32))
    h1 = jnp.maximum(x2d @ _bf16(w1) + b1, 0.0)
    h2 = jnp.maximum(_bf16(h1) @ _bf16(w2) + b2, 0.0)
    logits = _bf16(h2) @ _bf16(w3) + b3
    return _bf16(logits)                          # kernel writes bf16 logits


def mlp_reference_f32(x, params):
    w1, b1, w2, b2, w3, b3 = params
    x2d = x.reshape(-1, IN_F).astype(jnp.float32)
    h1 = jnp.maximum(x2d @ w1 + b1, 0.0)
    h2 = jnp.maximum(h1 @ w2 + b2, 0.0)
    return h2 @ w3 + b3


if __name__ == "__main__":
    key = jax.random.PRNGKey(0)
    k_x, k_x2, k_p = jax.random.split(key, 3)
    params = init_params(k_p)

    # MNIST-like NCHW input: batch=2, channels=1, 28x28 (flattens to 784).
    x = jax.random.normal(k_x, (2, 1, 28, 28), dtype=jnp.float32)
    out = jax.block_until_ready(mlp_forward(x, params))
    assert out.shape == (2, 10), out.shape
    assert jnp.allclose(out, mlp_reference_bf16(x, params), atol=2e-3, rtol=2e-3)
    assert jnp.allclose(out, mlp_reference_f32(x, params), atol=1e-1, rtol=1e-1)

    # Exercise the multi-tile grid + ragged last block (B=40 not a multiple of tb=16).
    x2 = jax.random.normal(k_x2, (40, 1, 28, 28), dtype=jnp.float32)
    out2 = jax.block_until_ready(mlp_forward(x2, params, tb=16))
    assert out2.shape == (40, 10), out2.shape
    assert jnp.allclose(out2, mlp_reference_bf16(x2, params), atol=2e-3, rtol=2e-3)

    print("KERNEL_OK")
</pallas_src>

<mosaic_0001>
module attributes {stable_mosaic.version = 11 : i64} {
  func.func @mlp_kernel(%arg0: i32, %arg1: memref<16x784xf32, #tpu.memory_space<vmem>>, %arg2: memref<784x128xbf16, #tpu.memory_space<vmem>>, %arg3: memref<1x128xf32, #tpu.memory_space<vmem>>, %arg4: memref<128x64xbf16, #tpu.memory_space<vmem>>, %arg5: memref<1x64xf32, #tpu.memory_space<vmem>>, %arg6: memref<64x128xbf16, #tpu.memory_space<vmem>>, %arg7: memref<1x128xf32, #tpu.memory_space<vmem>>, %arg8: memref<16x128xbf16, #tpu.memory_space<vmem>>) attributes {dimension_semantics = [#tpu.dimension_semantics<parallel>], iteration_bounds = array<i64: 1>, scalar_prefetch = 0 : i64, scratch_operands = 0 : i64, tpu.core_type = #tpu.core_type<tc>, window_params = [{transform_indices = @transform_0, window_bounds = array<i64: 16, 784>}, {pipeline_mode = #tpu.pipeline_mode<synchronous>, transform_indices = @transform_1, window_bounds = array<i64: 784, 128>}, {pipeline_mode = #tpu.pipeline_mode<synchronous>, transform_indices = @transform_2, window_bounds = array<i64: 1, 128>}, {pipeline_mode = #tpu.pipeline_mode<synchronous>, transform_indices = @transform_3, window_bounds = array<i64: 128, 64>}, {pipeline_mode = #tpu.pipeline_mode<synchronous>, transform_indices = @transform_4, window_bounds = array<i64: 1, 64>}, {pipeline_mode = #tpu.pipeline_mode<synchronous>, transform_indices = @transform_5, window_bounds = array<i64: 64, 128>}, {pipeline_mode = #tpu.pipeline_mode<synchronous>, transform_indices = @transform_6, window_bounds = array<i64: 1, 128>}, {transform_indices = @transform_7, window_bounds = array<i64: 16, 128>}]} {
    %c0 = arith.constant 0 : index
    %c0_0 = arith.constant 0 : index
    %0 = vector.load %arg1[%c0, %c0_0] : memref<16x784xf32, #tpu.memory_space<vmem>>, vector<16x784xf32>
    %1 = arith.truncf %0 : vector<16x784xf32> to vector<16x784xbf16>
    %c0_1 = arith.constant 0 : index
    %c0_2 = arith.constant 0 : index
    %2 = vector.load %arg2[%c0_1, %c0_2] : memref<784x128xbf16, #tpu.memory_space<vmem>>, vector<784x128xbf16>
    %cst = arith.constant dense<0.000000e+00> : vector<16x128xf32>
    %3 = tpu.matmul %1, %2, %cst {dimension_numbers = #tpu.dot_dimension_numbers<[1], [0], [0], [1], [0, 0, 1, 1], [], []>} : vector<16x784xbf16>, vector<784x128xbf16>, vector<16x128xf32> -> vector<16x128xf32>
    %c0_3 = arith.constant 0 : index
    %c0_4 = arith.constant 0 : index
    %4 = vector.load %arg3[%c0_3, %c0_4] : memref<1x128xf32, #tpu.memory_space<vmem>>, vector<1x128xf32>
    %5 = vector.broadcast %4 : vector<1x128xf32> to vector<16x128xf32>
    %6 = arith.addf %3, %5 : vector<16x128xf32>
    %cst_5 = arith.constant 0.000000e+00 : f32
    %7 = vector.broadcast %cst_5 : f32 to vector<16x128xf32>
    %8 = arith.maximumf %6, %7 : vector<16x128xf32>
    %9 = arith.truncf %8 : vector<16x128xf32> to vector<16x128xbf16>
    %c0_6 = arith.constant 0 : index
    %c0_7 = arith.constant 0 : index
    %10 = vector.load %arg4[%c0_6, %c0_7] : memref<128x64xbf16, #tpu.memory_space<vmem>>, vector<128x64xbf16>
    %cst_8 = arith.constant dense<0.000000e+00> : vector<16x64xf32>
    %11 = tpu.matmul %9, %10, %cst_8 {dimension_numbers = #tpu.dot_dimension_numbers<[1], [0], [0], [1], [0, 0, 1, 1], [], []>} : vector<16x128xbf16>, vector<128x64xbf16>, vector<16x64xf32> -> vector<16x64xf32>
    %c0_9 = arith.constant 0 : index
    %c0_10 = arith.constant 0 : index
    %12 = vector.load %arg5[%c0_9, %c0_10] : memref<1x64xf32, #tpu.memory_space<vmem>>, vector<1x64xf32>
    %13 = vector.broadcast %12 : vector<1x64xf32> to vector<16x64xf32>
    %14 = arith.addf %11, %13 : vector<16x64xf32>
    %cst_11 = arith.constant 0.000000e+00 : f32
    %15 = vector.broadcast %cst_11 : f32 to vector<16x64xf32>
    %16 = arith.maximumf %14, %15 : vector<16x64xf32>
    %17 = arith.truncf %16 : vector<16x64xf32> to vector<16x64xbf16>
    %c0_12 = arith.constant 0 : index
    %c0_13 = arith.constant 0 : index
    %18 = vector.load %arg6[%c0_12, %c0_13] : memref<64x128xbf16, #tpu.memory_space<vmem>>, vector<64x128xbf16>
    %cst_14 = arith.constant dense<0.000000e+00> : vector<16x128xf32>
    %19 = tpu.matmul %17, %18, %cst_14 {dimension_numbers = #tpu.dot_dimension_numbers<[1], [0], [0], [1], [0, 0, 1, 1], [], []>} : vector<16x64xbf16>, vector<64x128xbf16>, vector<16x128xf32> -> vector<16x128xf32>
    %c0_15 = arith.constant 0 : index
    %c0_16 = arith.constant 0 : index
    %20 = vector.load %arg7[%c0_15, %c0_16] : memref<1x128xf32, #tpu.memory_space<vmem>>, vector<1x128xf32>
    %21 = vector.broadcast %20 : vector<1x128xf32> to vector<16x128xf32>
    %22 = arith.addf %19, %21 : vector<16x128xf32>
    %23 = arith.truncf %22 : vector<16x128xf32> to vector<16x128xbf16>
    %c0_17 = arith.constant 0 : index
    %c0_18 = arith.constant 0 : index
    %24 = vector.load %arg8[%c0_17, %c0_18] : memref<16x128xbf16, #tpu.memory_space<vmem>>, vector<16x128xbf16>
    tpu.vector_store %arg8[%c0_17, %c0_18], %23 {strides = array<i32>} : memref<16x128xbf16, #tpu.memory_space<vmem>>, vector<16x128xbf16>,
    return
  }
  func.func @transform_0(%arg0: i32) -> (i32, i32) {
    %c0_i32 = arith.constant 0 : i32
    %c0_i32_0 = arith.constant 0 : i32
    return %arg0, %c0_i32 : i32, i32
  }
  func.func @transform_1(%arg0: i32) -> (i32, i32) {
    %c0_i32 = arith.constant 0 : i32
    %c0_i32_0 = arith.constant 0 : i32
    %c0_i32_1 = arith.constant 0 : i32
    return %c0_i32, %c0_i32_0 : i32, i32
  }
  func.func @transform_2(%arg0: i32) -> (i32, i32) {
    %c0_i32 = arith.constant 0 : i32
    %c0_i32_0 = arith.constant 0 : i32
    %c0_i32_1 = arith.constant 0 : i32
    return %c0_i32, %c0_i32_0 : i32, i32
  }
  func.func @transform_3(%arg0: i32) -> (i32, i32) {
    %c0_i32 = arith.constant 0 : i32
    %c0_i32_0 = arith.constant 0 : i32
    %c0_i32_1 = arith.constant 0 : i32
    return %c0_i32, %c0_i32_0 : i32, i32
  }
  func.func @transform_4(%arg0: i32) -> (i32, i32) {
    %c0_i32 = arith.constant 0 : i32
    %c0_i32_0 = arith.constant 0 : i32
    %c0_i32_1 = arith.constant 0 : i32
    return %c0_i32, %c0_i32_0 : i32, i32
  }
  func.func @transform_5(%arg0: i32) -> (i32, i32) {
    %c0_i32 = arith.constant 0 : i32
    %c0_i32_0 = arith.constant 0 : i32
    %c0_i32_1 = arith.constant 0 : i32
    return %c0_i32, %c0_i32_0 : i32, i32
  }
  func.func @transform_6(%arg0: i32) -> (i32, i32) {
    %c0_i32 = arith.constant 0 : i32
    %c0_i32_0 = arith.constant 0 : i32
    %c0_i32_1 = arith.constant 0 : i32
    return %c0_i32, %c0_i32_0 : i32, i32
  }
  func.func @transform_7(%arg0: i32) -> (i32, i32) {
    %c0_i32 = arith.constant 0 : i32
    %c0_i32_0 = arith.constant 0 : i32
    return %arg0, %c0_i32 : i32, i32
  }
}

</mosaic_0001>

<llo_original>
// kernel: tpu_custom_call.1
$region0: #{tpu_custom_call.1}
  #allocation0 [shape = 'u32[]', space=smem, size = 0x4, offset = 0x4, fixed_abs, tag = 'smem constant byte address 0x4 - core index']
  #allocation1 [shape = 'u32[72,128]{1,0:T(1,128)}', space=vmem, size = 0x9000, scoped, tag = 'internal scratch']
  %s0 = inlined_call_operand.vmem [shape: f32[2,784], index: 0, kind: input, shape index: {}]
  %s1 = inlined_call_operand.hbm [shape: bf16[784,128], index: 1, kind: input, shape index: {}]
  %s2 = inlined_call_operand.vmem [shape: f32[1,128], index: 2, kind: input, shape index: {}]
  %s3 = inlined_call_operand.vmem [shape: bf16[128,64], index: 3, kind: input, shape index: {}]
  %s4 = inlined_call_operand.vmem [shape: f32[1,64], index: 4, kind: input, shape index: {}]
  %s5 = inlined_call_operand.vmem [shape: bf16[64,128], index: 5, kind: input, shape index: {}]
  %s6 = inlined_call_operand.vmem [shape: f32[1,128], index: 6, kind: input, shape index: {}]
  %s7 = inlined_call_operand.hbm [shape: bf16[2,128], index: 7, kind: output, shape index: {}]
  %s8 = sld [smem:[#allocation0]]
  $region42: #{tpu_custom_call.1} parent=0
    _
  %s10 = ssub.s32 1, %s8
  %s11 = scalar_select 0, %s10, %s8
  $region1: #{tpu_custom_call.1} parent=0
    #allocation2 [shape = 'u8[200704]{0}', space=vmem, size = 0x31000, scoped, tag = 'input window, operand 1, single buffered']
    #allocation3 [shape = 's32[1]{0}', space=sflag, size = 0x4, scoped, tag = 'scoped memory for tpu_custom_call.1']
    #allocation4 [shape = 's32[1]{0}', space=sflag, size = 0x4, scoped, tag = 'scoped memory for tpu_custom_call.1']
    #allocation5 [shape = 'u8[4096]{0}', space=vmem, size = 0x1000, scoped, tag = 'output window, operand 0, single buffered']
    %12 = vsyncpa [#allocation3], 0
    %13 = vsyncpa [#allocation4], 0
    // Predicated region
    $region2: #{tpu_custom_call.1} parent=1 // pred_check
      _
    $region3: #{tpu_custom_call.1} parent=1 // pred_check_branch
      %15 = sbr.rel (0) target = $region5
    $region4: #{tpu_custom_call.1} parent=1 // pred_region
      _
    $region5: #{tpu_custom_call.1} parent=1 // pred_fallthru
      _
    // Predicated region
    $region6: #{tpu_custom_call.1} parent=1 // pred_check
      _
    $region7: #{tpu_custom_call.1} parent=1 // pred_check_branch
      %17 = sbr.rel (0) target = $region9
    $region8: #{tpu_custom_call.1} parent=1 // pred_region
      %19 = vsyncadd [#allocation3], 0
      %s20 = sshll.u32 %s1, 4
      %s21 = int_to_ptr.hbm [resolvable:$true] %s20
      %s22 = sshll.u32 [#allocation2], 4
      %s23 = int_to_ptr.vmem [resolvable:$true] %s22
      %28 = dma.hbm_to_vmem [thread:$0]  %s21, 6272, %s23, [#allocation3], 64, 64, 4
    $region9: #{tpu_custom_call.1} parent=1 // pred_fallthru
      _
    // Predicated region
    $region10: #{tpu_custom_call.1} parent=1 // pred_check
      _
    $region11: #{tpu_custom_call.1} parent=1 // pred_check_branch
      %30 = sbr.rel (0) target = $region13
    $region12: #{tpu_custom_call.1} parent=1 // pred_region
      _
    $region13: #{tpu_custom_call.1} parent=1 // pred_fallthru
      _
    // Predicated region
    $region14: #{tpu_custom_call.1} parent=1 // pred_check
      _
    $region15: #{tpu_custom_call.1} parent=1 // pred_check_branch
      %32 = sbr.rel (0) target = $region17
    $region16: #{tpu_custom_call.1} parent=1 // pred_region
      _
    $region17: #{tpu_custom_call.1} parent=1 // pred_fallthru
      _
    // Predicated region
    $region18: #{tpu_custom_call.1} parent=1 // pred_check
      _
    $region19: #{tpu_custom_call.1} parent=1 // pred_check_branch
      %34 = sbr.rel (0) target = $region21
    $region20: #{tpu_custom_call.1} parent=1 // pred_region
      _
    $region21: #{tpu_custom_call.1} parent=1 // pred_fallthru
      _
    // Predicated region
    $region22: #{tpu_custom_call.1} parent=1 // pred_check
      _
    $region23: #{tpu_custom_call.1} parent=1 // pred_check_branch
      %36 = sbr.rel (0) target = $region25
    $region24: #{tpu_custom_call.1} parent=1 // pred_region
      _
    $region25: #{tpu_custom_call.1} parent=1 // pred_fallthru
      _
    // Predicated region
    $region26: #{tpu_custom_call.1} parent=1 // pred_check
      _
    $region27: #{tpu_custom_call.1} parent=1 // pred_check_branch
      %38 = sbr.rel (0) target = $region29
    $region28: #{tpu_custom_call.1} parent=1 // pred_region
      _
    $region29: #{tpu_custom_call.1} parent=1 // pred_fallthru
      _
    // Predicated region
    $region30: #{tpu_custom_call.1} parent=1 // pred_check
      _
    $region31: #{tpu_custom_call.1} parent=1 // pred_check_branch
      %40 = sbr.rel (0) target = $region33
    $region32: #{tpu_custom_call.1} parent=1 // pred_region
      %42 = dma.done [#allocation3], 6272
    $region33: #{tpu_custom_call.1} parent=1 // pred_fallthru
      _
    %v44 = vld [vmem:[%s0] sm:$0xff]
    %v45 = vld [vmem:[%s0 + $0x8] sm:$0x3f]
    %v46 = vld [vmem:[%s0 + $0xe] sm:$0xff]
    %v47 = vld [vmem:[%s0 + $0x16] sm:$0x3f]
    %v48 = vld [vmem:[%s0 + $0x1c] sm:$0xff]
    %v49 = vld [vmem:[%s0 + $0x24] sm:$0x3f]
    %v50 = vld [vmem:[%s0 + $0x2a] sm:$0xff]
    %v51 = vld [vmem:[%s0 + $0x32] sm:$0x3f]
    %v52 = vld [vmem:[%s0 + $0x38] sm:$0xff]
    %v53 = vld [vmem:[%s0 + $0x40] sm:$0x3f]
    %v54 = vld [vmem:[%s0 + $0x46] sm:$0xff]
    %v55 = vld [vmem:[%s0 + $0x4e] sm:$0x3f]
    %v56 = vld [vmem:[%s0 + $0x54] sm:$0xff]
    %v57 = vld [vmem:[%s0 + $0x5c] sm:$0x3f]
    %v58 = vld [vmem:[%s0 + $0x62] sm:$0xff]
    %v59 = vld [vmem:[%s0 + $0x6a] sm:$0x3f]
    %76 = vst [vmem:[#allocation1] ss:$4 sm:$0xff] %v44
    %s77 = scalar_lea.vmem [#allocation1], 1
    %78 = vst [vmem:[%s77] ss:$4 sm:$0xff] %v46
    %s79 = scalar_lea.vmem [#allocation1], 2
    %80 = vst [vmem:[%s79] ss:$4 sm:$0xff] %v48
    %s81 = scalar_lea.vmem [#allocation1], 3
    %82 = vst [vmem:[%s81] ss:$4 sm:$0xff] %v50
    %s83 = scalar_lea.vmem [#allocation1], 32
    %84 = vst [vmem:[%s83] ss:$4 sm:$0xff] %v45
    %s85 = scalar_lea.vmem [#allocation1], 33
    %86 = vst [vmem:[%s85] ss:$4 sm:$0xff] %v47
    %s87 = scalar_lea.vmem [#allocation1], 34
    %88 = vst [vmem:[%s87] ss:$4 sm:$0xff] %v49
    %s89 = scalar_lea.vmem [#allocation1], 35
    %90 = vst [vmem:[%s89] ss:$4 sm:$0xff] %v51
    %v91 = vld.sshfl [vmem:[#allocation1] sm:$0xff pattern:$0x73625140]
    %v92 = vld.sshfl [vmem:[#allocation1 + $0x8] sm:$0xff pattern:$0x73625140]
    %v93 = vld.sshfl [vmem:[#allocation1 + $0x10] sm:$0xff pattern:$0x73625140]
    %v94 = vld.sshfl [vmem:[#allocation1 + $0x18] sm:$0xff pattern:$0x73625140]
    %v95 = vld.sshfl [vmem:[#allocation1 + $0x20] sm:$0xff pattern:$0x73625140]
    %v96 = vld.sshfl [vmem:[#allocation1 + $0x28] sm:$0xff pattern:$0x73625140]
    %v97 = vld.sshfl [vmem:[#allocation1 + $0x30] sm:$0xff pattern:$0x73625140]
    %98 = vst [vmem:[#allocation1] ss:$4 sm:$0xff] %v52
    %99 = vst [vmem:[%s77] ss:$4 sm:$0xff] %v54
    %100 = vst [vmem:[%s79] ss:$4 sm:$0xff] %v56
    %101 = vst [vmem:[%s81] ss:$4 sm:$0xff] %v58
    %102 = vst [vmem:[%s83] ss:$4 sm:$0xff] %v53
    %103 = vst [vmem:[%s85] ss:$4 sm:$0xff] %v55
    %104 = vst [vmem:[%s87] ss:$4 sm:$0xff] %v57
    %105 = vst [vmem:[%s89] ss:$4 sm:$0xff] %v59
    %v106 = vld.sshfl [vmem:[#allocation1] sm:$0xff pattern:$0x73625140]
    %v107 = vld.sshfl [vmem:[#allocation1 + $0x8] sm:$0xff pattern:$0x73625140]
    %v108 = vld.sshfl [vmem:[#allocation1 + $0x10] sm:$0xff pattern:$0x73625140]
    %v109 = vld.sshfl [vmem:[#allocation1 + $0x18] sm:$0xff pattern:$0x73625140]
    %v110 = vld.sshfl [vmem:[#allocation1 + $0x20] sm:$0xff pattern:$0x73625140]
    %v111 = vld.sshfl [vmem:[#allocation1 + $0x28] sm:$0xff pattern:$0x73625140]
    %v112 = vld.sshfl [vmem:[#allocation1 + $0x30] sm:$0xff pattern:$0x73625140]
    %v127 = vpack.c.bf16 %v106, %v91
    %v128 = vpack.c.bf16 %v107, %v92
    %v129 = vpack.c.bf16 %v108, %v93
    %v130 = vpack.c.bf16 %v109, %v94
    %v131 = vpack.c.bf16 %v110, %v95
    %v132 = vpack.c.bf16 %v111, %v96
    %v133 = vpack.c.bf16 %v112, %v97
    %v134 = vld [vmem:[#allocation2] sm:$0xf]
    %v135 = vld [vmem:[#allocation2 + $0x4] sm:$0xf]
    %v136 = vld [vmem:[#allocation2 + $0x8] sm:$0xf]
    %v137 = vld [vmem:[#allocation2 + $0xc] sm:$0xf]
    %v138 = vld [vmem:[#allocation2 + $0x10] sm:$0xf]
    %v139 = vld [vmem:[#allocation2 + $0x14] sm:$0xf]
    %v140 = vld [vmem:[#allocation2 + $0x18] sm:$0xf]
    %v141 = vld [vmem:[#allocation2 + $0x1c] sm:$0xf]
    %v142 = vld [vmem:[#allocation2 + $0x20] sm:$0xf]
    %v143 = vld [vmem:[#allocation2 + $0x24] sm:$0xf]
    %v144 = vld [vmem:[#allocation2 + $0x28] sm:$0xf]
    %v145 = vld [vmem:[#allocation2 + $0x2c] sm:$0xf]
    %v146 = vld [vmem:[#allocation2 + $0x30] sm:$0xf]
    %v147 = vld [vmem:[#allocation2 + $0x34] sm:$0xf]
    %v148 = vld [vmem:[#allocation2 + $0x38] sm:$0xf]
    %v149 = vld [vmem:[#allocation2 + $0x3c] sm:$0xf]
    %v150 = vld [vmem:[#allocation2 + $0x40] sm:$0xf]
    %v151 = vld [vmem:[#allocation2 + $0x44] sm:$0xf]
    %v152 = vld [vmem:[#allocation2 + $0x48] sm:$0xf]
    %v153 = vld [vmem:[#allocation2 + $0x4c] sm:$0xf]
    %v154 = vld [vmem:[#allocation2 + $0x50] sm:$0xf]
    %v155 = vld [vmem:[#allocation2 + $0x54] sm:$0xf]
    %v156 = vld [vmem:[#allocation2 + $0x58] sm:$0xf]
    %v157 = vld [vmem:[#allocation2 + $0x5c] sm:$0xf]
    %v158 = vld [vmem:[#allocation2 + $0x60] sm:$0xf]
    %v159 = vld [vmem:[#allocation2 + $0x64] sm:$0xf]
    %v160 = vld [vmem:[#allocation2 + $0x68] sm:$0xf]
    %v161 = vld [vmem:[#allocation2 + $0x6c] sm:$0xf]
    %v162 = vld [vmem:[#allocation2 + $0x70] sm:$0xf]
    %v163 = vld [vmem:[#allocation2 + $0x74] sm:$0xf]
    %v164 = vld [vmem:[#allocation2 + $0x78] sm:$0xf]
    %v165 = vld [vmem:[#allocation2 + $0x7c] sm:$0xf]
    %v166 = vld [vmem:[#allocation2 + $0x80] sm:$0xf]
    %v167 = vld [vmem:[#allocation2 + $0x84] sm:$0xf]
    %v168 = vld [vmem:[#allocation2 + $0x88] sm:$0xf]
    %v169 = vld [vmem:[#allocation2 + $0x8c] sm:$0xf]
    %v170 = vld [vmem:[#allocation2 + $0x90] sm:$0xf]
    %v171 = vld [vmem:[#allocation2 + $0x94] sm:$0xf]
    %v172 = vld [vmem:[#allocation2 + $0x98] sm:$0xf]
    %v173 = vld [vmem:[#allocation2 + $0x9c] sm:$0xf]
    %v174 = vld [vmem:[#allocation2 + $0xa0] sm:$0xf]
    %v175 = vld [vmem:[#allocation2 + $0xa4] sm:$0xf]
    %v176 = vld [vmem:[#allocation2 + $0xa8] sm:$0xf]
    %v177 = vld [vmem:[#allocation2 + $0xac] sm:$0xf]
    %v178 = vld [vmem:[#allocation2 + $0xb0] sm:$0xf]
    %v179 = vld [vmem:[#allocation2 + $0xb4] sm:$0xf]
    %v180 = vld [vmem:[#allocation2 + $0xb8] sm:$0xf]
    %v181 = vld [vmem:[#allocation2 + $0xbc] sm:$0xf]
    %v182 = vld [vmem:[#allocation2 + $0xc0] sm:$0xf]
    %v183 = vld [vmem:[#allocation2 + $0xc4] sm:$0xf]
    %v184 = vld [vmem:[#allocation2 + $0xc8] sm:$0xf]
    %v185 = vld [vmem:[#allocation2 + $0xcc] sm:$0xf]
    %v186 = vld [vmem:[#allocation2 + $0xd0] sm:$0xf]
    %v187 = vld [vmem:[#allocation2 + $0xd4] sm:$0xf]
    %v188 = vld [vmem:[#allocation2 + $0xd8] sm:$0xf]
    %v189 = vld [vmem:[#allocation2 + $0xdc] sm:$0xf]
    %v190 = vld [vmem:[#allocation2 + $0xe0] sm:$0xf]
    %v191 = vld [vmem:[#allocation2 + $0xe4] sm:$0xf]
    %v192 = vld [vmem:[#allocation2 + $0xe8] sm:$0xf]
    %v193 = vld [vmem:[#allocation2 + $0xec] sm:$0xf]
    %v194 = vld [vmem:[#allocation2 + $0xf0] sm:$0xf]
    %v195 = vld [vmem:[#allocation2 + $0xf4] sm:$0xf]
    %v196 = vld [vmem:[#allocation2 + $0xf8] sm:$0xf]
    %v197 = vld [vmem:[#allocation2 + $0xfc] sm:$0xf]
    %v198 = vld [vmem:[#allocation2 + $0x100] sm:$0xf]
    %v199 = vld [vmem:[#allocation2 + $0x104] sm:$0xf]
    %v200 = vld [vmem:[#allocation2 + $0x108] sm:$0xf]
    %v201 = vld [vmem:[#allocation2 + $0x10c] sm:$0xf]
    %v202 = vld [vmem:[#allocation2 + $0x110] sm:$0xf]
    %v203 = vld [vmem:[#allocation2 + $0x114] sm:$0xf]
    %v204 = vld [vmem:[#allocation2 + $0x118] sm:$0xf]
    %v205 = vld [vmem:[#allocation2 + $0x11c] sm:$0xf]
    %v206 = vld [vmem:[#allocation2 + $0x120] sm:$0xf]
    %v207 = vld [vmem:[#allocation2 + $0x124] sm:$0xf]
    %v208 = vld [vmem:[#allocation2 + $0x128] sm:$0xf]
    %v209 = vld [vmem:[#allocation2 + $0x12c] sm:$0xf]
    %v210 = vld [vmem:[#allocation2 + $0x130] sm:$0xf]
    %v211 = vld [vmem:[#allocation2 + $0x134] sm:$0xf]
    %v212 = vld [vmem:[#allocation2 + $0x138] sm:$0xf]
    %v213 = vld [vmem:[#allocation2 + $0x13c] sm:$0xf]
    %v214 = vld [vmem:[#allocation2 + $0x140] sm:$0xf]
    %v215 = vld [vmem:[#allocation2 + $0x144] sm:$0xf]
    %v216 = vld [vmem:[#allocation2 + $0x148] sm:$0xf]
    %v217 = vld [vmem:[#allocation2 + $0x14c] sm:$0xf]
    %v218 = vld [vmem:[#allocation2 + $0x150] sm:$0xf]
    %v219 = vld [vmem:[#allocation2 + $0x154] sm:$0xf]
    %v220 = vld [vmem:[#allocation2 + $0x158] sm:$0xf]
    %v221 = vld [vmem:[#allocation2 + $0x15c] sm:$0xf]
    %v222 = vld [vmem:[#allocation2 + $0x160] sm:$0xf]
    %v223 = vld [vmem:[#allocation2 + $0x164] sm:$0xf]
    %v224 = vld [vmem:[#allocation2 + $0x168] sm:$0xf]
    %v225 = vld [vmem:[#allocation2 + $0x16c] sm:$0xf]
    %v226 = vld [vmem:[#allocation2 + $0x170] sm:$0xf]
    %v227 = vld [vmem:[#allocation2 + $0x174] sm:$0xf]
    %v228 = vld [vmem:[#allocation2 + $0x178] sm:$0xf]
    %v229 = vld [vmem:[#allocation2 + $0x17c] sm:$0xf]
    %v230 = vld [vmem:[#allocation2 + $0x180] sm:$0xf]
    %v231 = vld [vmem:[#allocation2 + $0x184] sm:$0xf]
    %v232 = vld [vmem:[%s2] sm:$0x1]
    %v234 = vperm.slane %v232, 0
    %v334 = vunpack.c.l.b16 %v134
    %v335 = vunpack.c.l.b16 %v135
    %v336 = vunpack.c.l.b16 %v136
    %v337 = vunpack.c.l.b16 %v137
    %v338 = vunpack.c.l.b16 %v138
    %v339 = vunpack.c.l.b16 %v139
    %v340 = vunpack.c.l.b16 %v140
    %v341 = vunpack.c.l.b16 %v141
    %v342 = vunpack.c.l.b16 %v142
    %v343 = vunpack.c.l.b16 %v143
    %v344 = vunpack.c.l.b16 %v144
    %v345 = vunpack.c.l.b16 %v145
    %v346 = vunpack.c.l.b16 %v146
    %v347 = vunpack.c.l.b16 %v147
    %v348 = vunpack.c.l.b16 %v148
    %v349 = vunpack.c.l.b16 %v149
    %v350 = vunpack.c.l.b16 %v150
    %v351 = vunpack.c.l.b16 %v151
    %v352 = vunpack.c.l.b16 %v152
    %v353 = vunpack.c.l.b16 %v153
    %v354 = vunpack.c.l.b16 %v154
    %v355 = vunpack.c.l.b16 %v155
    %v356 = vunpack.c.l.b16 %v156
    %v357 = vunpack.c.l.b16 %v157
    %v358 = vunpack.c.l.b16 %v158
    %v359 = vunpack.c.l.b16 %v159
    %v360 = vunpack.c.l.b16 %v160
    %v361 = vunpack.c.l.b16 %v161
    %v362 = vunpack.c.l.b16 %v162
    %v363 = vunpack.c.l.b16 %v163
    %v364 = vunpack.c.l.b16 %v164
    %v365 = vunpack.c.l.b16 %v165
    %v366 = vunpack.c.l.b16 %v166
    %v367 = vunpack.c.l.b16 %v167
    %v368 = vunpack.c.l.b16 %v168
    %v369 = vunpack.c.l.b16 %v169
    %v370 = vunpack.c.l.b16 %v170
    %v371 = vunpack.c.l.b16 %v171
    %v372 = vunpack.c.l.b16 %v172
    %v373 = vunpack.c.l.b16 %v173
    %v374 = vunpack.c.l.b16 %v174
    %v375 = vunpack.c.l.b16 %v175
    %v376 = vunpack.c.l.b16 %v176
    %v377 = vunpack.c.l.b16 %v177
    %v378 = vunpack.c.l.b16 %v178
    %v379 = vunpack.c.l.b16 %v179
    %v380 = vunpack.c.l.b16 %v180
    %v381 = vunpack.c.l.b16 %v181
    %v382 = vunpack.c.l.b16 %v182
    %v383 = vunpack.c.l.b16 %v183
    %v384 = vunpack.c.l.b16 %v184
    %v385 = vunpack.c.l.b16 %v185
    %v386 = vunpack.c.l.b16 %v186
    %v387 = vunpack.c.l.b16 %v187
    %v388 = vunpack.c.l.b16 %v188
    %v389 = vunpack.c.l.b16 %v189
    %v390 = vunpack.c.l.b16 %v190
    %v391 = vunpack.c.l.b16 %v191
    %v392 = vunpack.c.l.b16 %v192
    %v393 = vunpack.c.l.b16 %v193
    %v394 = vunpack.c.l.b16 %v194
    %v395 = vunpack.c.l.b16 %v195
    %v396 = vunpack.c.l.b16 %v196
    %v397 = vunpack.c.l.b16 %v197
    %v398 = vunpack.c.l.b16 %v198
    %v399 = vunpack.c.l.b16 %v199
    %v400 = vunpack.c.l.b16 %v200
    %v401 = vunpack.c.l.b16 %v201
    %v402 = vunpack.c.l.b16 %v202
    %v403 = vunpack.c.l.b16 %v203
    %v404 = vunpack.c.l.b16 %v204
    %v405 = vunpack.c.l.b16 %v205
    %v406 = vunpack.c.l.b16 %v206
    %v407 = vunpack.c.l.b16 %v207
    %v408 = vunpack.c.l.b16 %v208
    %v409 = vunpack.c.l.b16 %v209
    %v410 = vunpack.c.l.b16 %v210
    %v411 = vunpack.c.l.b16 %v211
    %v412 = vunpack.c.l.b16 %v212
    %v413 = vunpack.c.l.b16 %v213
    %v414 = vunpack.c.l.b16 %v214
    %v415 = vunpack.c.l.b16 %v215
    %v416 = vunpack.c.l.b16 %v216
    %v417 = vunpack.c.l.b16 %v217
    %v418 = vunpack.c.l.b16 %v218
    %v419 = vunpack.c.l.b16 %v219
    %v420 = vunpack.c.l.b16 %v220
    %v421 = vunpack.c.l.b16 %v221
    %v422 = vunpack.c.l.b16 %v222
    %v423 = vunpack.c.l.b16 %v223
    %v424 = vunpack.c.l.b16 %v224
    %v425 = vunpack.c.l.b16 %v225
    %v426 = vunpack.c.l.b16 %v226
    %v427 = vunpack.c.l.b16 %v227
    %v428 = vunpack.c.l.b16 %v228
    %v429 = vunpack.c.l.b16 %v229
    %v430 = vunpack.c.l.b16 %v230
    %v431 = vunpack.c.l.b16 %v231
    %v432 = vpack.c.b16 %v335, %v334
    %v433 = vpack.c.b16 %v337, %v336
    %v434 = vpack.c.b16 %v339, %v338
    %v435 = vpack.c.b16 %v341, %v340
    %v436 = vpack.c.b16 %v343, %v342
    %v437 = vpack.c.b16 %v345, %v344
    %v438 = vpack.c.b16 %v347, %v346
    %v439 = vpack.c.b16 %v349, %v348
    %v440 = vpack.c.b16 %v351, %v350
    %v441 = vpack.c.b16 %v353, %v352
    %v442 = vpack.c.b16 %v355, %v354
    %v443 = vpack.c.b16 %v357, %v356
    %v444 = vpack.c.b16 %v359, %v358
    %v445 = vpack.c.b16 %v361, %v360
    %v446 = vpack.c.b16 %v363, %v362
    %v447 = vpack.c.b16 %v365, %v364
    %v448 = vpack.c.b16 %v367, %v366
    %v449 = vpack.c.b16 %v369, %v368
    %v450 = vpack.c.b16 %v371, %v370
    %v451 = vpack.c.b16 %v373, %v372
    %v452 = vpack.c.b16 %v375, %v374
    %v453 = vpack.c.b16 %v377, %v376
    %v454 = vpack.c.b16 %v379, %v378
    %v455 = vpack.c.b16 %v381, %v380
    %v456 = vpack.c.b16 %v383, %v382
    %v457 = vpack.c.b16 %v385, %v384
    %v458 = vpack.c.b16 %v387, %v386
    %v459 = vpack.c.b16 %v389, %v388
    %v460 = vpack.c.b16 %v391, %v390
    %v461 = vpack.c.b16 %v393, %v392
    %v462 = vpack.c.b16 %v395, %v394
    %v463 = vpack.c.b16 %v397, %v396
    %v464 = vpack.c.b16 %v399, %v398
    %v465 = vpack.c.b16 %v401, %v400
    %v466 = vpack.c.b16 %v403, %v402
    %v467 = vpack.c.b16 %v405, %v404
    %v468 = vpack.c.b16 %v407, %v406
    %v469 = vpack.c.b16 %v409, %v408
    %v470 = vpack.c.b16 %v411, %v410
    %v471 = vpack.c.b16 %v413, %v412
    %v472 = vpack.c.b16 %v415, %v414
    %v473 = vpack.c.b16 %v417, %v416
    %v474 = vpack.c.b16 %v419, %v418
    %v475 = vpack.c.b16 %v421, %v420
    %v476 = vpack.c.b16 %v423, %v422
    %v477 = vpack.c.b16 %v425, %v424
    %v478 = vpack.c.b16 %v427, %v426
    %v479 = vpack.c.b16 %v429, %v428
    %v480 = vpack.c.b16 %v431, %v430
    %vm530 = vcmask 130048
    %v532 = vsel %vm530, %v133, 0
    %534 = vmatpush.bf16.msra.mxu0 %v439
    %535 = vmatpush.bf16.msra.mxu0 %v438
    %536 = vmatpush.bf16.msra.mxu0 %v437
    %537 = vmatpush.bf16.msra.mxu0 %v436
    %538 = vmatpush.bf16.msra.mxu0 %v435
    %539 = vmatpush.bf16.msra.mxu0 %v434
    %540 = vmatpush.bf16.msra.mxu0 %v433
    %541 = vmatpush.bf16.msra.mxu0 %v432
    %542 = vmatmul.bf16.gmra.mxu0 %v127
    %v543 = vpop.f32.mrf.mxu0
    %v544 = vadd.f32 %v234, %v543
    %v545 = vpop.f32.mrf.mxu0
    %v546 = vadd.f32 %v234, %v545
    %547 = vdwg.mxu0
    %548 = vmatpush.bf16.msra.mxu0 %v447
    %549 = vmatpush.bf16.msra.mxu0 %v446
    %550 = vmatpush.bf16.msra.mxu0 %v445
    %551 = vmatpush.bf16.msra.mxu0 %v444
    %552 = vmatpush.bf16.msra.mxu0 %v443
    %553 = vmatpush.bf16.msra.mxu0 %v442
    %554 = vmatpush.bf16.msra.mxu0 %v441
    %555 = vmatpush.bf16.msra.mxu0 %v440
    %556 = vmatmul.bf16.gmra.mxu0 %v128
    %v557 = vpop.f32.mrf.mxu0
    %v558 = vadd.f32 %v544, %v557
    %v559 = vpop.f32.mrf.mxu0
    %v560 = vadd.f32 %v546, %v559
    %561 = vdwg.mxu0
    %562 = vmatpush.bf16.msra.mxu0 %v455
    %563 = vmatpush.bf16.msra.mxu0 %v454
    %564 = vmatpush.bf16.msra.mxu0 %v453
    %565 = vmatpush.bf16.msra.mxu0 %v452
    %566 = vmatpush.bf16.msra.mxu0 %v451
    %567 = vmatpush.bf16.msra.mxu0 %v450
    %568 = vmatpush.bf16.msra.mxu0 %v449
    %569 = vmatpush.bf16.msra.mxu0 %v448
    %570 = vmatmul.bf16.gmra.mxu0 %v129
    %v571 = vpop.f32.mrf.mxu0
    %v572 = vadd.f32 %v558, %v571
    %v573 = vpop.f32.mrf.mxu0
    %v574 = vadd.f32 %v560, %v573
    %575 = vdwg.mxu0
    %576 = vmatpush.bf16.msra.mxu0 %v463
    %577 = vmatpush.bf16.msra.mxu0 %v462
    %578 = vmatpush.bf16.msra.mxu0 %v461
    %579 = vmatpush.bf16.msra.mxu0 %v460
    %580 = vmatpush.bf16.msra.mxu0 %v459
    %581 = vmatpush.bf16.msra.mxu0 %v458
    %582 = vmatpush.bf16.msra.mxu0 %v457
    %583 = vmatpush.bf16.msra.mxu0 %v456
    %584 = vmatmul.bf16.gmra.mxu0 %v130
    %v585 = vpop.f32.mrf.mxu0
    %v586 = vadd.f32 %v572, %v585
    %v587 = vpop.f32.mrf.mxu0
    %v588 = vadd.f32 %v574, %v587
    %589 = vdwg.mxu0
    %590 = vmatpush.bf16.msra.mxu0 %v471
    %591 = vmatpush.bf16.msra.mxu0 %v470
    %592 = vmatpush.bf16.msra.mxu0 %v469
    %593 = vmatpush.bf16.msra.mxu0 %v468
    %594 = vmatpush.bf16.msra.mxu0 %v467
    %595 = vmatpush.bf16.msra.mxu0 %v466
    %596 = vmatpush.bf16.msra.mxu0 %v465
    %597 = vmatpush.bf16.msra.mxu0 %v464
    %598 = vmatmul.bf16.gmra.mxu0 %v131
    %v599 = vpop.f32.mrf.mxu0
    %v600 = vadd.f32 %v586, %v599
    %v601 = vpop.f32.mrf.mxu0
    %v602 = vadd.f32 %v588, %v601
    %603 = vdwg.mxu0
    %604 = vmatpush.bf16.msra.mxu0 %v479
    %605 = vmatpush.bf16.msra.mxu0 %v478
    %606 = vmatpush.bf16.msra.mxu0 %v477
    %607 = vmatpush.bf16.msra.mxu0 %v476
    %608 = vmatpush.bf16.msra.mxu0 %v475
    %609 = vmatpush.bf16.msra.mxu0 %v474
    %610 = vmatpush.bf16.msra.mxu0 %v473
    %611 = vmatpush.bf16.msra.mxu0 %v472
    %612 = vmatmul.bf16.gmra.mxu0 %v132
    %v613 = vpop.f32.mrf.mxu0
    %v614 = vadd.f32 %v600, %v613
    %v615 = vpop.f32.mrf.mxu0
    %v616 = vadd.f32 %v602, %v615
    %617 = vdwg.mxu0
    %618 = vmatpush.bf16.msra.mxu0 0
    %619 = vmatpush.bf16.msra.mxu0 0
    %620 = vmatpush.bf16.msra.mxu0 0
    %621 = vmatpush.bf16.msra.mxu0 0
    %622 = vmatpush.bf16.msra.mxu0 0
    %623 = vmatpush.bf16.msra.mxu0 0
    %624 = vmatpush.bf16.msra.mxu0 0
    %625 = vmatpush.bf16.msra.mxu0 %v480
    %626 = vmatmul.bf16.gmra.mxu0 %v532
    %v627 = vpop.f32.mrf.mxu0
    %v628 = vadd.f32 %v614, %v627
    %v629 = vpop.f32.mrf.mxu0
    %v630 = vadd.f32 %v616, %v629
    %631 = vdwg.mxu0
    %v632 = vmax.f32 %v628, 0.0
    %v633 = vmax.f32 %v630, 0.0
    %v634 = vpack.c.bf16 %v633, %v632
    %v635 = vld [vmem:[%s3] sm:$0xf]
    %v636 = vld [vmem:[%s3 + $0x4] sm:$0xf]
    %v637 = vld [vmem:[%s3 + $0x8] sm:$0xf]
    %v638 = vld [vmem:[%s3 + $0xc] sm:$0xf]
    %v639 = vld [vmem:[%s3 + $0x10] sm:$0xf]
    %v640 = vld [vmem:[%s3 + $0x14] sm:$0xf]
    %v641 = vld [vmem:[%s3 + $0x18] sm:$0xf]
    %v642 = vld [vmem:[%s3 + $0x1c] sm:$0xf]
    %v643 = vld [vmem:[%s3 + $0x20] sm:$0xf]
    %v644 = vld [vmem:[%s3 + $0x24] sm:$0xf]
    %v645 = vld [vmem:[%s3 + $0x28] sm:$0xf]
    %v646 = vld [vmem:[%s3 + $0x2c] sm:$0xf]
    %v647 = vld [vmem:[%s3 + $0x30] sm:$0xf]
    %v648 = vld [vmem:[%s3 + $0x34] sm:$0xf]
    %v649 = vld [vmem:[%s3 + $0x38] sm:$0xf]
    %v650 = vld [vmem:[%s3 + $0x3c] sm:$0xf]
    %v651 = vld [vmem:[%s4] sm:$0x1]
    %v653 = vperm.slane %v651, 0
    %v671 = vunpack.c.l.b16 %v635
    %v672 = vunpack.c.l.b16 %v636
    %v673 = vunpack.c.l.b16 %v637
    %v674 = vunpack.c.l.b16 %v638
    %v675 = vunpack.c.l.b16 %v639
    %v676 = vunpack.c.l.b16 %v640
    %v677 = vunpack.c.l.b16 %v641
    %v678 = vunpack.c.l.b16 %v642
    %v679 = vunpack.c.l.b16 %v643
    %v680 = vunpack.c.l.b16 %v644
    %v681 = vunpack.c.l.b16 %v645
    %v682 = vunpack.c.l.b16 %v646
    %v683 = vunpack.c.l.b16 %v647
    %v684 = vunpack.c.l.b16 %v648
    %v685 = vunpack.c.l.b16 %v649
    %v686 = vunpack.c.l.b16 %v650
    %v687 = vpack.c.b16 %v672, %v671
    %v688 = vpack.c.b16 %v674, %v673
    %v689 = vpack.c.b16 %v676, %v675
    %v690 = vpack.c.b16 %v678, %v677
    %v691 = vpack.c.b16 %v680, %v679
    %v692 = vpack.c.b16 %v682, %v681
    %v693 = vpack.c.b16 %v684, %v683
    %v694 = vpack.c.b16 %v686, %v685
    %703 = vmatpush.bf16.msra.mxu0 %v694
    %704 = vmatpush.bf16.msra.mxu0 %v693
    %705 = vmatpush.bf16.msra.mxu0 %v692
    %706 = vmatpush.bf16.msra.mxu0 %v691
    %707 = vmatpush.bf16.msra.mxu0 %v690
    %708 = vmatpush.bf16.msra.mxu0 %v689
    %709 = vmatpush.bf16.msra.mxu0 %v688
    %710 = vmatpush.bf16.msra.mxu0 %v687
    %711 = vmatmul.bf16.gmra.mxu0 %v634
    %v712 = vpop.f32.mrf.mxu0
    %v713 = vadd.f32 %v653, %v712
    %v714 = vpop.f32.mrf.mxu0
    %v715 = vadd.f32 %v653, %v714
    %716 = vdwg.mxu0
    %v717 = vmax.f32 %v713, 0.0
    %v718 = vmax.f32 %v715, 0.0
    %v719 = vpack.c.bf16 %v718, %v717
    %v720 = vld [vmem:[%s5] sm:$0xf]
    %v721 = vld [vmem:[%s5 + $0x4] sm:$0xf]
    %v722 = vld [vmem:[%s5 + $0x8] sm:$0xf]
    %v723 = vld [vmem:[%s5 + $0xc] sm:$0xf]
    %v724 = vld [vmem:[%s5 + $0x10] sm:$0xf]
    %v725 = vld [vmem:[%s5 + $0x14] sm:$0xf]
    %v726 = vld [vmem:[%s5 + $0x18] sm:$0xf]
    %v727 = vld [vmem:[%s5 + $0x1c] sm:$0xf]
    %v728 = vld [vmem:[%s6] sm:$0x1]
    %v730 = vperm.slane %v728, 0
    %v740 = vunpack.c.l.b16 %v720
    %v741 = vunpack.c.l.b16 %v721
    %v742 = vunpack.c.l.b16 %v722
    %v743 = vunpack.c.l.b16 %v723
    %v744 = vunpack.c.l.b16 %v724
    %v745 = vunpack.c.l.b16 %v725
    %v746 = vunpack.c.l.b16 %v726
    %v747 = vunpack.c.l.b16 %v727
    %v748 = vpack.c.b16 %v741, %v740
    %v749 = vpack.c.b16 %v743, %v742
    %v750 = vpack.c.b16 %v745, %v744
    %v751 = vpack.c.b16 %v747, %v746
    %vm756 = vcmask 523264
    %v758 = vsel %vm756, %v719, 0
    %760 = vmatpush.bf16.msra.mxu0 0
    %761 = vmatpush.bf16.msra.mxu0 0
    %762 = vmatpush.bf16.msra.mxu0 0
    %763 = vmatpush.bf16.msra.mxu0 0
    %764 = vmatpush.bf16.msra.mxu0 %v751
    %765 = vmatpush.bf16.msra.mxu0 %v750
    %766 = vmatpush.bf16.msra.mxu0 %v749
    %767 = vmatpush.bf16.msra.mxu0 %v748
    %768 = vmatmul.bf16.gmra.mxu0 %v758
    %v769 = vpop.f32.mrf.mxu0
    %v770 = vadd.f32 %v730, %v769
    %v771 = vpop.f32.mrf.mxu0
    %v772 = vadd.f32 %v730, %v771
    %773 = vdwg.mxu0
    %v774 = vpack.c.bf16 %v770, %v770
    %v775 = vpack.c.bf16 %v772, %v772
    %v778 = vrot.slane %v774, 3
    %v779 = vrot.slane %v775, 3
    %vm780 = vcmask 1040384
    %v783 = vsel %vm780, %v774, %v778
    %vm784 = vcmask 1041409
    %v785 = vsel %vm784, %v774, %v778
    %v787 = vrot.slane %v785, 1
    %vm788 = vcmask 1042434
    %v789 = vsel %vm788, %v774, %v778
    %v791 = vrot.slane %v789, 2
    %vm792 = vcmask 1043459
    %v793 = vsel %vm792, %v774, %v778
    %v795 = vrot.slane %v793, 3
    %v798 = vsel %vm780, %v775, %v779
    %v799 = vsel %vm784, %v775, %v779
    %v801 = vrot.slane %v799, 1
    %v802 = vsel %vm788, %v775, %v779
    %v804 = vrot.slane %v802, 2
    %v805 = vsel %vm792, %v775, %v779
    %v807 = vrot.slane %v805, 3
    %816 = vst [vmem:[#allocation5] sm:$0x1] %v783
    %817 = vst [vmem:[#allocation5 + $0x1] sm:$0x1] %v787
    %818 = vst [vmem:[#allocation5 + $0x2] sm:$0x1] %v791
    %819 = vst [vmem:[#allocation5 + $0x3] sm:$0x1] %v795
    %820 = vst [vmem:[#allocation5 + $0x4] sm:$0x1] %v798
    %821 = vst [vmem:[#allocation5 + $0x5] sm:$0x1] %v801
    %822 = vst [vmem:[#allocation5 + $0x6] sm:$0x1] %v804
    %823 = vst [vmem:[#allocation5 + $0x7] sm:$0x1] %v807
    // Predicated region
    $region34: #{tpu_custom_call.1} parent=1 // pred_check
      _
    $region35: #{tpu_custom_call.1} parent=1 // pred_check_branch
      %825 = sbr.rel (0) target = $region37
    $region36: #{tpu_custom_call.1} parent=1 // pred_region
      %827 = vsyncadd [#allocation4], 112
      %s828 = sshll.u32 [#allocation5], 4
      %s829 = int_to_ptr.vmem [resolvable:$true] %s828
      %s830 = sshll.u32 %s7, 4
      %s831 = int_to_ptr.hbm [resolvable:$true] %s830
      %836 = dma.vmem_to_hbm [thread:$0]  %s829, 16, %s831, [#allocation4], 16, 16, 1
    $region37: #{tpu_custom_call.1} parent=1 // pred_fallthru
      _
    // Predicated region
    $region38: #{tpu_custom_call.1} parent=1 // pred_check
      _
    $region39: #{tpu_custom_call.1} parent=1 // pred_check_branch
      %838 = sbr.rel (0) target = $region41
    $region40: #{tpu_custom_call.1} parent=1 // pred_region
      %840 = dma.done [#allocation4], 128
    $region41: #{tpu_custom_call.1} parent=1 // pred_fallthru
      _
    %841 = vsyncpa [#allocation3], 1
    %842 = vsyncpa [#allocation4], 1

</llo_original>
